<compile_context>
chip_gen: v7x
topology: tpu7x:2x2x1
jax: 0.10.0
libtpu: 0.0.40
codegen_flags: <defaults>
</compile_context>

<pallas_src>
import functools
from math import sqrt

import jax
import jax.numpy as jnp
from jax import lax
from jax.experimental import pallas as pl
from jax.experimental.pallas import tpu as pltpu


def _round_up(x, m):
    return ((x + m - 1) // m) * m


def _act_dtype_for(x_dtype):
    """SiLU compute dtype: bf16 on chips with a bf16 VPU/EUP (v6e/v7x), else f32."""
    if jnp.dtype(x_dtype) == jnp.dtype(jnp.bfloat16):
        try:
            kind = jax.devices()[0].device_kind.lower()
        except Exception:
            kind = ""
        if "v5" not in kind:
            return jnp.bfloat16
    return jnp.float32


# ----------------------------- kernels ------------------------------------


def _silu_linear_kernel(x_ref, w_ref, b_ref, o_ref, *, act_dtype):
    # x: (tb, F), w: (F, Ncols), b: (1, Ncols) f32, o: (tb, Ncols)
    x = x_ref[...]
    xa = x.astype(act_dtype)
    act = (xa * jax.nn.sigmoid(xa)).astype(x.dtype)          # SiLU
    y = lax.dot_general(                                     # MXU: K on W sublanes
        act, w_ref[...],
        dimension_numbers=(((1,), (0,)), ((), ())),
        preferred_element_type=jnp.float32)
    y = y + b_ref[...].astype(jnp.float32)
    o_ref[...] = y.astype(o_ref.dtype)


def _silu_linear_split_kernel(x_ref, w_ref, b_ref, scale_ref, shift_ref, *,
                              act_dtype, c_pad):
    # w is packed as [W_scale.T | W_shift.T], each block c_pad lanes wide.
    x = x_ref[...]
    xa = x.astype(act_dtype)
    act = (xa * jax.nn.sigmoid(xa)).astype(x.dtype)
    y = lax.dot_general(
        act, w_ref[...],
        dimension_numbers=(((1,), (0,)), ((), ())),
        preferred_element_type=jnp.float32)
    y = y + b_ref[...].astype(jnp.float32)
    scale_ref[...] = y[:, :c_pad].astype(scale_ref.dtype)    # static lane-tile slices
    shift_ref[...] = y[:, c_pad:].astype(shift_ref.dtype)


# --------------------------- tiling helpers --------------------------------

_VMEM_FOOTPRINT_BUDGET = 24 * 1024 * 1024  # conservative across v5e/v6e/v7x


def _pick_batch_tile(B, F, n_cols, itemsize, block_b):
    def footprint(tb):
        # resident weight (single-buffered) + bias + double-buffered x/out tiles
        return (F * n_cols + n_cols) * itemsize + 2 * tb * (F + n_cols) * itemsize

    tb = min(block_b, B)
    if B >= 16:
        # guarantee >= 2 grid steps so the "parallel" axis can use both v7x TCs
        half = _round_up(-(-B // 2), 8)
        tb = min(tb, half)
    if tb < B:
        tb = max(8, (tb // 8) * 8)         # sublane-aligned partial-batch tiles
    while footprint(tb) > _VMEM_FOOTPRINT_BUDGET and tb > 8:
        tb = max(8, tb // 2)
    return tb, footprint(tb)


def _call_pallas(kernel, x, w_packed, b_packed, out_shape, out_specs, tb, grid,
                 vmem_limit, cost):
    F = x.shape[1]
    n_cols = w_packed.shape[1]

    def make_in_specs(single_buffer_params):
        kw = dict(pipeline_mode=pl.Buffered(1)) if single_buffer_params else {}
        return [
            pl.BlockSpec((tb, F), lambda i: (i, 0)),             # x: tiled, pipelined
            pl.BlockSpec((F, n_cols), lambda i: (0, 0), **kw),   # weight: resident
            pl.BlockSpec((1, n_cols), lambda i: (0, 0), **kw),   # bias: resident
        ]

    def run(single_buffer_params):
        return pl.pallas_call(
            kernel,
            out_shape=out_shape,
            grid=grid,
            in_specs=make_in_specs(single_buffer_params),
            out_specs=out_specs,
            compiler_params=pltpu.CompilerParams(
                dimension_semantics=("parallel",),
                vmem_limit_bytes=vmem_limit),
            cost_estimate=cost,
        )(x, w_packed, b_packed)

    try:
        return run(True)
    except Exception:
        # pl.Buffered(1) unsupported on this jax build -> default double buffering.
        return run(False)


# ------------------------------ wrapper -------------------------------------


def mapping_to_scale_shift(mapping, weight, bias, *, block_b=1024, use_pallas=None):
    """SiLU -> Linear(F, 2C) -> 'b c -> b c 1' -> chunk(2, dim=1).

    mapping: (B, F); weight: (2C, F) (PyTorch nn.Linear layout); bias: (2C,).
    Returns (scale, shift), each of shape (B, C, 1).
    """
    B, F = mapping.shape
    twoC = weight.shape[0]
    assert weight.shape == (twoC, F) and bias.shape == (twoC,) and twoC % 2 == 0
    C = twoC // 2
    dtype = mapping.dtype
    itemsize = jnp.dtype(dtype).itemsize

    # Tiny problems are pure launch overhead on the Pallas path -> fused jnp.
    if use_pallas is None:
        use_pallas = (B * F > 8192) or (B * twoC > 8192)
    if not use_pallas:
        x32 = mapping.astype(jnp.float32)
        a = x32 * jax.nn.sigmoid(x32)
        y = (a @ weight.T.astype(jnp.float32) + bias.astype(jnp.float32)).astype(dtype)
        return y[:, :C, None], y[:, C:, None]

    act_dtype = _act_dtype_for(dtype)

    if C >= 128:
        # Two lane-dense outputs -> downstream 'b c -> b c 1' is a pure reshape,
        # no extra HBM read/write pass for the chunk.
        c_pad = _round_up(C, 128)
        n_cols = 2 * c_pad
        w_packed = jnp.zeros((F, n_cols), dtype=dtype)
        w_packed = w_packed.at[:, :C].set(weight[:C].T.astype(dtype))
        w_packed = w_packed.at[:, c_pad:c_pad + C].set(weight[C:].T.astype(dtype))
        b_packed = jnp.zeros((1, n_cols), dtype=jnp.float32)
        b_packed = b_packed.at[0, :C].set(bias[:C].astype(jnp.float32))
        b_packed = b_packed.at[0, c_pad:c_pad + C].set(bias[C:].astype(jnp.float32))

        tb, fp = _pick_batch_tile(B, F, n_cols, itemsize, block_b)
        grid = (pl.cdiv(B, tb),)
        vmem_limit = min(48 * 1024 * 1024,
                         max(8 * 1024 * 1024, int(1.5 * fp) + (2 << 20)))
        cost = pl.CostEstimate(
            flops=2 * B * F * n_cols,
            transcendentals=B * F,
            bytes_accessed=(B * F + F * n_cols + n_cols + 2 * B * c_pad) * itemsize)

        kernel = functools.partial(_silu_linear_split_kernel,
                                   act_dtype=act_dtype, c_pad=c_pad)
        out_shape = (jax.ShapeDtypeStruct((B, c_pad), dtype),
                     jax.ShapeDtypeStruct((B, c_pad), dtype))
        out_specs = (pl.BlockSpec((tb, c_pad), lambda i: (i, 0)),
                     pl.BlockSpec((tb, c_pad), lambda i: (i, 0)))
        scale, shift = _call_pallas(kernel, mapping, w_packed, b_packed,
                                    out_shape, out_specs, tb, grid, vmem_limit, cost)
        return scale[:, :C, None], shift[:, :C, None]

    # C < 128: single lane-padded output, chunk in the wrapper.
    n_cols = _round_up(twoC, 128)
    w_packed = jnp.zeros((F, n_cols), dtype=dtype)
    w_packed = w_packed.at[:, :twoC].set(weight.T.astype(dtype))
    b_packed = jnp.zeros((1, n_cols), dtype=jnp.float32)
    b_packed = b_packed.at[0, :twoC].set(bias.astype(jnp.float32))

    tb, fp = _pick_batch_tile(B, F, n_cols, itemsize, block_b)
    grid = (pl.cdiv(B, tb),)
    vmem_limit = min(48 * 1024 * 1024,
                     max(8 * 1024 * 1024, int(1.5 * fp) + (2 << 20)))
    cost = pl.CostEstimate(
        flops=2 * B * F * n_cols,
        transcendentals=B * F,
        bytes_accessed=(B * F + F * n_cols + n_cols + B * n_cols) * itemsize)

    kernel = functools.partial(_silu_linear_kernel, act_dtype=act_dtype)
    out_shape = jax.ShapeDtypeStruct((B, n_cols), dtype)
    out_specs = pl.BlockSpec((tb, n_cols), lambda i: (i, 0))
    y = _call_pallas(kernel, mapping, w_packed, b_packed,
                     out_shape, out_specs, tb, grid, vmem_limit, cost)
    return y[:, :C, None], y[:, C:twoC, None]


# ------------------------------ reference -----------------------------------


def _reference(mapping, weight, bias):
    x = mapping.astype(jnp.float32)
    a = x * jax.nn.sigmoid(x)
    y = a @ weight.T.astype(jnp.float32) + bias.astype(jnp.float32)
    y = y.astype(mapping.dtype)
    C = weight.shape[0] // 2
    return y[:, :C, None], y[:, C:, None]


if __name__ == "__main__":
    key = jax.random.PRNGKey(0)
    ks = jax.random.split(key, 6)

    # --- Spec-sized demo: B=2, F=32, C=8 (single-output path, C < 128) ---
    B, FEAT, CH = 2, 32, 8
    bound = 1.0 / sqrt(FEAT)
    mapping = jax.random.normal(ks[0], (B, FEAT), dtype=jnp.float32)
    weight = jax.random.uniform(ks[1], (2 * CH, FEAT), minval=-bound,
                                maxval=bound, dtype=jnp.float32)
    bias = jax.random.uniform(ks[2], (2 * CH,), minval=-bound, maxval=bound,
                              dtype=jnp.float32)

    ref_s, ref_h = _reference(mapping, weight, bias)

    s0, h0 = mapping_to_scale_shift(mapping, weight, bias)                 # auto: jnp fallback
    s1, h1 = mapping_to_scale_shift(mapping, weight, bias, use_pallas=True)  # Pallas kernel
    jax.block_until_ready((s0, h0, s1, h1))

    assert s1.shape == (B, CH, 1) and h1.shape == (B, CH, 1)
    for s, h in ((s0, h0), (s1, h1)):
        assert jnp.allclose(s, ref_s, atol=5e-3, rtol=5e-3)
        assert jnp.allclose(h, ref_h, atol=5e-3, rtol=5e-3)

    # --- Wide-channel case: exercises the two-output (scale/shift) kernel ---
    B2, F2, C2 = 16, 64, 128
    bound2 = 1.0 / sqrt(F2)
    m2 = jax.random.normal(ks[3], (B2, F2), dtype=jnp.float32)
    w2 = jax.random.uniform(ks[4], (2 * C2, F2), minval=-bound2, maxval=bound2,
                            dtype=jnp.float32)
    b2 = jax.random.uniform(ks[5], (2 * C2,), minval=-bound2, maxval=bound2,
                            dtype=jnp.float32)

    s2, h2 = mapping_to_scale_shift(m2, w2, b2, use_pallas=True)
    jax.block_until_ready((s2, h2))
    r2s, r2h = _reference(m2, w2, b2)
    assert s2.shape == (B2, C2, 1) and h2.shape == (B2, C2, 1)
    assert jnp.allclose(s2, r2s, atol=5e-3, rtol=5e-3)
    assert jnp.allclose(h2, r2h, atol=5e-3, rtol=5e-3)

    print("KERNEL_OK")
</pallas_src>

<mosaic_0001>
module attributes {stable_mosaic.version = 11 : i64} {
  func.func @_silu_linear_kernel(%arg0: i32, %arg1: memref<2x32xf32, #tpu.memory_space<vmem>>, %arg2: memref<32x128xf32, #tpu.memory_space<vmem>>, %arg3: memref<1x128xf32, #tpu.memory_space<vmem>>, %arg4: memref<2x128xf32, #tpu.memory_space<vmem>>) attributes {dimension_semantics = [#tpu.dimension_semantics<parallel>], iteration_bounds = array<i64: 1>, scalar_prefetch = 0 : i64, scratch_operands = 0 : i64, tpu.core_type = #tpu.core_type<tc>, window_params = [{transform_indices = @transform_0, window_bounds = array<i64: 2, 32>}, {pipeline_mode = #tpu.pipeline_mode<synchronous>, transform_indices = @transform_1, window_bounds = array<i64: 32, 128>}, {pipeline_mode = #tpu.pipeline_mode<synchronous>, transform_indices = @transform_2, window_bounds = array<i64: 1, 128>}, {transform_indices = @transform_3, window_bounds = array<i64: 2, 128>}]} {
    %c0 = arith.constant 0 : index
    %c0_0 = arith.constant 0 : index
    %0 = vector.load %arg1[%c0, %c0_0] : memref<2x32xf32, #tpu.memory_space<vmem>>, vector<2x32xf32>
    %1 = arith.negf %0 : vector<2x32xf32>
    %2 = math.exp %1 : vector<2x32xf32>
    %cst = arith.constant 1.000000e+00 : f32
    %3 = vector.broadcast %cst : f32 to vector<2x32xf32>
    %4 = arith.addf %3, %2 : vector<2x32xf32>
    %5 = arith.divf %3, %4 : vector<2x32xf32>
    %6 = arith.mulf %0, %5 : vector<2x32xf32>
    %c0_1 = arith.constant 0 : index
    %c0_2 = arith.constant 0 : index
    %7 = vector.load %arg2[%c0_1, %c0_2] : memref<32x128xf32, #tpu.memory_space<vmem>>, vector<32x128xf32>
    %cst_3 = arith.constant dense<0.000000e+00> : vector<2x128xf32>
    %8 = tpu.matmul %6, %7, %cst_3 {dimension_numbers = #tpu.dot_dimension_numbers<[1], [0], [0], [1], [0, 0, 1, 1], [], []>} : vector<2x32xf32>, vector<32x128xf32>, vector<2x128xf32> -> vector<2x128xf32>
    %c0_4 = arith.constant 0 : index
    %c0_5 = arith.constant 0 : index
    %9 = vector.load %arg3[%c0_4, %c0_5] : memref<1x128xf32, #tpu.memory_space<vmem>>, vector<1x128xf32>
    %10 = vector.broadcast %9 : vector<1x128xf32> to vector<2x128xf32>
    %11 = arith.addf %8, %10 : vector<2x128xf32>
    %c0_6 = arith.constant 0 : index
    %c0_7 = arith.constant 0 : index
    %12 = vector.load %arg4[%c0_6, %c0_7] : memref<2x128xf32, #tpu.memory_space<vmem>>, vector<2x128xf32>
    tpu.vector_store %arg4[%c0_6, %c0_7], %11 {strides = array<i32>} : memref<2x128xf32, #tpu.memory_space<vmem>>, vector<2x128xf32>,
    return
  }
  func.func @transform_0(%arg0: i32) -> (i32, i32) {
    %c0_i32 = arith.constant 0 : i32
    %c0_i32_0 = arith.constant 0 : i32
    return %arg0, %c0_i32 : i32, i32
  }
  func.func @transform_1(%arg0: i32) -> (i32, i32) {
    %c0_i32 = arith.constant 0 : i32
    %c0_i32_0 = arith.constant 0 : i32
    %c0_i32_1 = arith.constant 0 : i32
    return %c0_i32, %c0_i32_0 : i32, i32
  }
  func.func @transform_2(%arg0: i32) -> (i32, i32) {
    %c0_i32 = arith.constant 0 : i32
    %c0_i32_0 = arith.constant 0 : i32
    %c0_i32_1 = arith.constant 0 : i32
    return %c0_i32, %c0_i32_0 : i32, i32
  }
  func.func @transform_3(%arg0: i32) -> (i32, i32) {
    %c0_i32 = arith.constant 0 : i32
    %c0_i32_0 = arith.constant 0 : i32
    return %arg0, %c0_i32 : i32, i32
  }
}

module attributes {stable_mosaic.version = 11 : i64} {
  func.func @_silu_linear_kernel(%arg0: i32, %arg1: memref<2x32xf32, #tpu.memory_space<vmem>>, %arg2: memref<32x128xf32, #tpu.memory_space<vmem>>, %arg3: memref<1x128xf32, #tpu.memory_space<vmem>>, %arg4: memref<2x128xf32, #tpu.memory_space<vmem>>) attributes {dimension_semantics = [#tpu.dimension_semantics<parallel>], iteration_bounds = array<i64: 1>, scalar_prefetch = 0 : i64, scratch_operands = 0 : i64, tpu.core_type = #tpu.core_type<tc>, window_params = [{transform_indices = @transform_0, window_bounds = array<i64: 2, 32>}, {pipeline_mode = #tpu.pipeline_mode<synchronous>, transform_indices = @transform_1, window_bounds = array<i64: 32, 128>}, {pipeline_mode = #tpu.pipeline_mode<synchronous>, transform_indices = @transform_2, window_bounds = array<i64: 1, 128>}, {transform_indices = @transform_3, window_bounds = array<i64: 2, 128>}]} {
    %c0 = arith.constant 0 : index
    %c0_0 = arith.constant 0 : index
    %0 = vector.load %arg1[%c0, %c0_0] : memref<2x32xf32, #tpu.memory_space<vmem>>, vector<2x32xf32>
    %1 = arith.negf %0 : vector<2x32xf32>
    %2 = math.exp %1 : vector<2x32xf32>
    %cst = arith.constant 1.000000e+00 : f32
    %3 = vector.broadcast %cst : f32 to vector<2x32xf32>
    %4 = arith.addf %3, %2 : vector<2x32xf32>
    %5 = arith.divf %3, %4 : vector<2x32xf32>
    %6 = arith.mulf %0, %5 : vector<2x32xf32>
    %c0_1 = arith.constant 0 : index
    %c0_2 = arith.constant 0 : index
    %7 = vector.load %arg2[%c0_1, %c0_2] : memref<32x128xf32, #tpu.memory_space<vmem>>, vector<32x128xf32>
    %cst_3 = arith.constant dense<0.000000e+00> : vector<2x128xf32>
    %8 = tpu.matmul %6, %7, %cst_3 {dimension_numbers = #tpu.dot_dimension_numbers<[1], [0], [0], [1], [0, 0, 1, 1], [], []>} : vector<2x32xf32>, vector<32x128xf32>, vector<2x128xf32> -> vector<2x128xf32>
    %c0_4 = arith.constant 0 : index
    %c0_5 = arith.constant 0 : index
    %9 = vector.load %arg3[%c0_4, %c0_5] : memref<1x128xf32, #tpu.memory_space<vmem>>, vector<1x128xf32>
    %10 = vector.broadcast %9 : vector<1x128xf32> to vector<2x128xf32>
    %11 = arith.addf %8, %10 : vector<2x128xf32>
    %c0_6 = arith.constant 0 : index
    %c0_7 = arith.constant 0 : index
    %12 = vector.load %arg4[%c0_6, %c0_7] : memref<2x128xf32, #tpu.memory_space<vmem>>, vector<2x128xf32>
    tpu.vector_store %arg4[%c0_6, %c0_7], %11 {strides = array<i32>} : memref<2x128xf32, #tpu.memory_space<vmem>>, vector<2x128xf32>,
    return
  }
  func.func @transform_0(%arg0: i32) -> (i32, i32) {
    %c0_i32 = arith.constant 0 : i32
    %c0_i32_0 = arith.constant 0 : i32
    return %arg0, %c0_i32 : i32, i32
  }
  func.func @transform_1(%arg0: i32) -> (i32, i32) {
    %c0_i32 = arith.constant 0 : i32
    %c0_i32_0 = arith.constant 0 : i32
    %c0_i32_1 = arith.constant 0 : i32
    return %c0_i32, %c0_i32_0 : i32, i32
  }
  func.func @transform_2(%arg0: i32) -> (i32, i32) {
    %c0_i32 = arith.constant 0 : i32
    %c0_i32_0 = arith.constant 0 : i32
    %c0_i32_1 = arith.constant 0 : i32
    return %c0_i32, %c0_i32_0 : i32, i32
  }
  func.func @transform_3(%arg0: i32) -> (i32, i32) {
    %c0_i32 = arith.constant 0 : i32
    %c0_i32_0 = arith.constant 0 : i32
    return %arg0, %c0_i32 : i32, i32
  }
}

</mosaic_0001>

<llo_original>
// kernel: tpu_custom_call.1
$region0: #{tpu_custom_call.1}
  #allocation0 [shape = 'u32[]', space=smem, size = 0x4, offset = 0x4, fixed_abs, tag = 'smem constant byte address 0x4 - core index']
  #allocation1 [shape = 'u32[144,128]{1,0:T(1,128)}', space=vmem, size = 0x12000, scoped, tag = 'internal scratch']
  %s0 = inlined_call_operand.hbm [shape: f32[2,32], index: 0, kind: input, shape index: {}]
  %s1 = inlined_call_operand.hbm [shape: f32[32,128], index: 1, kind: input, shape index: {}]
  %s2 = inlined_call_operand.vmem [shape: f32[1,128], index: 2, kind: input, shape index: {}]
  %s3 = inlined_call_operand.hbm [shape: f32[2,128], index: 3, kind: output, shape index: {}]
  %s4 = sld [smem:[#allocation0]]
  $region30: #{tpu_custom_call.1} parent=0
    _
  %s6 = ssub.s32 1, %s4
  %s7 = scalar_select 0, %s6, %s4
  $region1: #{tpu_custom_call.1} parent=0
    #allocation2 [shape = 'u8[1024]{0}', space=vmem, size = 0x400, scoped, tag = 'input window, operand 0, single buffered']
    #allocation3 [shape = 's32[1]{0}', space=sflag, size = 0x4, scoped, tag = 'scoped memory for tpu_custom_call.1']
    #allocation4 [shape = 's32[1]{0}', space=sflag, size = 0x4, scoped, tag = 'scoped memory for tpu_custom_call.1']
    #allocation5 [shape = 'u8[16384]{0}', space=vmem, size = 0x4000, scoped, tag = 'input window, operand 1, single buffered']
    #allocation6 [shape = 's32[1]{0}', space=sflag, size = 0x4, scoped, tag = 'scoped memory for tpu_custom_call.1']
    #allocation7 [shape = 'u8[1024]{0}', space=vmem, size = 0x400, scoped, tag = 'output window, operand 0, single buffered']
    %8 = vsyncpa [#allocation3], 0
    %9 = vsyncpa [#allocation6], 0
    %10 = vsyncpa [#allocation4], 0
    // Predicated region
    $region2: #{tpu_custom_call.1} parent=1 // pred_check
      _
    $region3: #{tpu_custom_call.1} parent=1 // pred_check_branch
      %12 = sbr.rel (0) target = $region5
    $region4: #{tpu_custom_call.1} parent=1 // pred_region
      %s14 = ssub.s32 32, 32
      %15 = vsyncadd [#allocation3], %s14
      %s17 = sshll.u32 [#allocation2], 4
      %s18 = int_to_ptr.vmem [resolvable:$true] %s17
      %20 = dma.hbm_to_vmem [thread:$0]  %s0, 32, %s18, [#allocation3]
    $region5: #{tpu_custom_call.1} parent=1 // pred_fallthru
      _
    // Predicated region
    $region6: #{tpu_custom_call.1} parent=1 // pred_check
      _
    $region7: #{tpu_custom_call.1} parent=1 // pred_check_branch
      %22 = sbr.rel (0) target = $region9
    $region8: #{tpu_custom_call.1} parent=1 // pred_region
      %s24 = ssub.s32 512, 512
      %25 = vsyncadd [#allocation6], %s24
      %s26 = sshll.u32 [#allocation5], 4
      %s27 = int_to_ptr.vmem [resolvable:$true] %s26
      %32 = dma.hbm_to_vmem [thread:$0]  %s1, 512, %s27, [#allocation6], 128, 128, 8
    $region9: #{tpu_custom_call.1} parent=1 // pred_fallthru
      _
    // Predicated region
    $region10: #{tpu_custom_call.1} parent=1 // pred_check
      _
    $region11: #{tpu_custom_call.1} parent=1 // pred_check_branch
      %34 = sbr.rel (0) target = $region13
    $region12: #{tpu_custom_call.1} parent=1 // pred_region
      _
    $region13: #{tpu_custom_call.1} parent=1 // pred_fallthru
      _
    // Predicated region
    $region14: #{tpu_custom_call.1} parent=1 // pred_check
      _
    $region15: #{tpu_custom_call.1} parent=1 // pred_check_branch
      %36 = sbr.rel (0) target = $region17
    $region16: #{tpu_custom_call.1} parent=1 // pred_region
      %37 = dma.done [#allocation3], 32
    $region17: #{tpu_custom_call.1} parent=1 // pred_fallthru
      _
    // Predicated region
    $region18: #{tpu_custom_call.1} parent=1 // pred_check
      _
    $region19: #{tpu_custom_call.1} parent=1 // pred_check_branch
      %39 = sbr.rel (0) target = $region21
    $region20: #{tpu_custom_call.1} parent=1 // pred_region
      %40 = dma.done [#allocation6], 512
    $region21: #{tpu_custom_call.1} parent=1 // pred_fallthru
      _
    %v41 = vld [vmem:[#allocation2] sm:$0x3]
    %v42 = vxor.u32 %v41, 2147483648
    %v43 = vmul.f32 %v42, 1.442695
    %v44 = vpow.pop %v43
    %v45 = vadd.f32 %v44, 1.0
    %v46 = vrcp.pop %v45
    %v47 = vmul.f32 1.0, %v46
    %v48 = vmul.f32 %v41, %v47
    %v49 = vld [vmem:[#allocation5] sm:$0xff]
    %v50 = vld [vmem:[#allocation5 + $0x8] sm:$0xff]
    %v51 = vld [vmem:[#allocation5 + $0x10] sm:$0xff]
    %v52 = vld [vmem:[#allocation5 + $0x18] sm:$0xff]
    %v53 = vld [vmem:[%s2] sm:$0x1]
    %v55 = vlaneseq
    %v56 = vshrl.u32 %v55, 7
    %v57 = vsub.s32 0, %v56
    %v58 = vrot.slane %v53, %v57
    %vm60 = vcmask 261120
    %v62 = vsel %vm60, %v48, 0
    %64 = vmatprep.subr.mxu0 0.0
    %65 = vmatpush1.msra.mxu0 %v49
    %66 = vmatprep.subr.mxu0 0.0
    %67 = vmatpush1.msra.mxu0 %v50
    %68 = vmatprep.subr.mxu0 0.0
    %69 = vmatpush1.msra.mxu0 %v51
    %70 = vmatprep.subr.mxu0 0.0
    %71 = vmatpush1.msra.mxu0 %v52
    %72 = vmatprep.subr.mxu0 0.0
    %73 = vmatpush1.msra.mxu0 0.0
    %74 = vmatprep.subr.mxu0 0.0
    %75 = vmatpush1.msra.mxu0 0.0
    %76 = vmatprep.subr.mxu0 0.0
    %77 = vmatpush1.msra.mxu0 0.0
    %78 = vmatprep.subr.mxu0 0.0
    %79 = vmatpush1.msra.mxu0 0.0
    %80 = vmatprep.subr.mxu0 0.0
    %81 = vmatpush1.msra.mxu0 0.0
    %82 = vmatprep.subr.mxu0 0.0
    %83 = vmatpush1.msra.mxu0 0.0
    %84 = vmatprep.subr.mxu0 0.0
    %85 = vmatpush1.msra.mxu0 0.0
    %86 = vmatprep.subr.mxu0 0.0
    %87 = vmatpush1.msra.mxu0 0.0
    %88 = vmatprep.subr.mxu0 0.0
    %89 = vmatpush1.msra.mxu0 0.0
    %90 = vmatprep.subr.mxu0 0.0
    %91 = vmatpush1.msra.mxu0 0.0
    %92 = vmatprep.subr.mxu0 0.0
    %93 = vmatpush1.msra.mxu0 0.0
    %94 = vmatprep.subr.mxu0 0.0
    %95 = vmatpush1.msra.mxu0 0.0
    %96 = vmatprep.subr.mxu0 0.0
    %97 = vmatpush1.msra.mxu0 0.0
    %98 = vmatprep.subr.mxu0 0.0
    %99 = vmatpush1.msra.mxu0 0.0
    %100 = vmatprep.subr.mxu0 0.0
    %101 = vmatpush1.msra.mxu0 0.0
    %102 = vmatprep.subr.mxu0 0.0
    %103 = vmatpush1.msra.mxu0 0.0
    %104 = vmatprep.subr.mxu0 0.0
    %105 = vmatpush1.msra.mxu0 0.0
    %106 = vmatprep.subr.mxu0 0.0
    %107 = vmatpush1.msra.mxu0 0.0
    %108 = vmatprep.subr.mxu0 0.0
    %109 = vmatpush1.msra.mxu0 0.0
    %110 = vmatprep.subr.mxu0 0.0
    %111 = vmatpush1.msra.mxu0 0.0
    %112 = vmatprep.subr.mxu0 0.0
    %113 = vmatpush1.msra.mxu0 0.0
    %114 = vmatprep.subr.mxu0 0.0
    %115 = vmatpush1.msra.mxu0 0.0
    %116 = vmatprep.subr.mxu0 0.0
    %117 = vmatpush1.msra.mxu0 0.0
    %118 = vmatprep.subr.mxu0 0.0
    %119 = vmatpush1.msra.mxu0 0.0
    %120 = vmatprep.subr.mxu0 0.0
    %121 = vmatpush1.msra.mxu0 0.0
    %122 = vmatprep.subr.mxu0 0.0
    %123 = vmatpush1.msra.mxu0 0.0
    %124 = vmatprep.subr.mxu0 0.0
    %125 = vmatpush1.msra.mxu0 0.0
    %126 = vmatprep.subr.mxu0 0.0
    %127 = vmatpush1.msra.mxu0 0.0
    %128 = vmatprep.mubr.f32.mxu0 0.0
    %129 = vmatmul.mubr.f32.gmra.mrb[0].mxu0 %v62
    %v130 = vpop.f32.mrb[0].mxu0
    %v131 = vadd.f32 %v58, %v130
    %v132 = vpop.f32.mrb[0].mxu0
    %133 = vdwg.mxu0
    %134 = vst [vmem:[#allocation7] sm:$0x3] %v131
    // Predicated region
    $region22: #{tpu_custom_call.1} parent=1 // pred_check
      _
    $region23: #{tpu_custom_call.1} parent=1 // pred_check_branch
      %136 = sbr.rel (0) target = $region25
    $region24: #{tpu_custom_call.1} parent=1 // pred_region
      %s138 = ssub.s32 32, 32
      %139 = vsyncadd [#allocation4], %s138
      %s141 = sshll.u32 [#allocation7], 4
      %s142 = int_to_ptr.vmem [resolvable:$true] %s141
      %144 = dma.vmem_to_hbm [thread:$0]  %s142, 32, %s3, [#allocation4]
    $region25: #{tpu_custom_call.1} parent=1 // pred_fallthru
      _
    // Predicated region
    $region26: #{tpu_custom_call.1} parent=1 // pred_check
      _
    $region27: #{tpu_custom_call.1} parent=1 // pred_check_branch
      %146 = sbr.rel (0) target = $region29
    $region28: #{tpu_custom_call.1} parent=1 // pred_region
      %147 = dma.done [#allocation4], 32
    $region29: #{tpu_custom_call.1} parent=1 // pred_fallthru
      _
    %148 = vsyncpa [#allocation3], 1
    %149 = vsyncpa [#allocation6], 1
    %150 = vsyncpa [#allocation4], 1

// kernel: tpu_custom_call.1
$region0: #{tpu_custom_call.1}
  #allocation0 [shape = 'u32[]', space=smem, size = 0x4, offset = 0x4, fixed_abs, tag = 'smem constant byte address 0x4 - core index']
  #allocation1 [shape = 'u32[144,128]{1,0:T(1,128)}', space=vmem, size = 0x12000, scoped, tag = 'internal scratch']
  %s0 = inlined_call_operand.hbm [shape: f32[2,32], index: 0, kind: input, shape index: {}]
  %s1 = inlined_call_operand.hbm [shape: f32[32,128], index: 1, kind: input, shape index: {}]
  %s2 = inlined_call_operand.vmem [shape: f32[1,128], index: 2, kind: input, shape index: {}]
  %s3 = inlined_call_operand.hbm [shape: f32[2,128], index: 3, kind: output, shape index: {}]
  %s4 = sld [smem:[#allocation0]]
  $region30: #{tpu_custom_call.1} parent=0
    _
  %s6 = ssub.s32 1, %s4
  %s7 = scalar_select 0, %s6, %s4
  $region1: #{tpu_custom_call.1} parent=0
    #allocation2 [shape = 'u8[1024]{0}', space=vmem, size = 0x400, scoped, tag = 'input window, operand 0, single buffered']
    #allocation3 [shape = 's32[1]{0}', space=sflag, size = 0x4, scoped, tag = 'scoped memory for tpu_custom_call.1']
    #allocation4 [shape = 's32[1]{0}', space=sflag, size = 0x4, scoped, tag = 'scoped memory for tpu_custom_call.1']
    #allocation5 [shape = 'u8[16384]{0}', space=vmem, size = 0x4000, scoped, tag = 'input window, operand 1, single buffered']
    #allocation6 [shape = 's32[1]{0}', space=sflag, size = 0x4, scoped, tag = 'scoped memory for tpu_custom_call.1']
    #allocation7 [shape = 'u8[1024]{0}', space=vmem, size = 0x400, scoped, tag = 'output window, operand 0, single buffered']
    %8 = vsyncpa [#allocation3], 0
    %9 = vsyncpa [#allocation6], 0
    %10 = vsyncpa [#allocation4], 0
    // Predicated region
    $region2: #{tpu_custom_call.1} parent=1 // pred_check
      _
    $region3: #{tpu_custom_call.1} parent=1 // pred_check_branch
      %12 = sbr.rel (0) target = $region5
    $region4: #{tpu_custom_call.1} parent=1 // pred_region
      %s14 = ssub.s32 32, 32
      %15 = vsyncadd [#allocation3], %s14
      %s17 = sshll.u32 [#allocation2], 4
      %s18 = int_to_ptr.vmem [resolvable:$true] %s17
      %20 = dma.hbm_to_vmem [thread:$0]  %s0, 32, %s18, [#allocation3]
    $region5: #{tpu_custom_call.1} parent=1 // pred_fallthru
      _
    // Predicated region
    $region6: #{tpu_custom_call.1} parent=1 // pred_check
      _
    $region7: #{tpu_custom_call.1} parent=1 // pred_check_branch
      %22 = sbr.rel (0) target = $region9
    $region8: #{tpu_custom_call.1} parent=1 // pred_region
      %s24 = ssub.s32 512, 512
      %25 = vsyncadd [#allocation6], %s24
      %s26 = sshll.u32 [#allocation5], 4
      %s27 = int_to_ptr.vmem [resolvable:$true] %s26
      %32 = dma.hbm_to_vmem [thread:$0]  %s1, 512, %s27, [#allocation6], 128, 128, 8
    $region9: #{tpu_custom_call.1} parent=1 // pred_fallthru
      _
    // Predicated region
    $region10: #{tpu_custom_call.1} parent=1 // pred_check
      _
    $region11: #{tpu_custom_call.1} parent=1 // pred_check_branch
      %34 = sbr.rel (0) target = $region13
    $region12: #{tpu_custom_call.1} parent=1 // pred_region
      _
    $region13: #{tpu_custom_call.1} parent=1 // pred_fallthru
      _
    // Predicated region
    $region14: #{tpu_custom_call.1} parent=1 // pred_check
      _
    $region15: #{tpu_custom_call.1} parent=1 // pred_check_branch
      %36 = sbr.rel (0) target = $region17
    $region16: #{tpu_custom_call.1} parent=1 // pred_region
      %37 = dma.done [#allocation3], 32
    $region17: #{tpu_custom_call.1} parent=1 // pred_fallthru
      _
    // Predicated region
    $region18: #{tpu_custom_call.1} parent=1 // pred_check
      _
    $region19: #{tpu_custom_call.1} parent=1 // pred_check_branch
      %39 = sbr.rel (0) target = $region21
    $region20: #{tpu_custom_call.1} parent=1 // pred_region
      %40 = dma.done [#allocation6], 512
    $region21: #{tpu_custom_call.1} parent=1 // pred_fallthru
      _
    %v41 = vld [vmem:[#allocation2] sm:$0x3]
    %v42 = vxor.u32 %v41, 2147483648
    %v43 = vmul.f32 %v42, 1.442695
    %v44 = vpow.pop %v43
    %v45 = vadd.f32 %v44, 1.0
    %v46 = vrcp.pop %v45
    %v47 = vmul.f32 1.0, %v46
    %v48 = vmul.f32 %v41, %v47
    %v49 = vld [vmem:[#allocation5] sm:$0xff]
    %v50 = vld [vmem:[#allocation5 + $0x8] sm:$0xff]
    %v51 = vld [vmem:[#allocation5 + $0x10] sm:$0xff]
    %v52 = vld [vmem:[#allocation5 + $0x18] sm:$0xff]
    %v53 = vld [vmem:[%s2] sm:$0x1]
    %v55 = vlaneseq
    %v56 = vshrl.u32 %v55, 7
    %v57 = vsub.s32 0, %v56
    %v58 = vrot.slane %v53, %v57
    %vm60 = vcmask 261120
    %v62 = vsel %vm60, %v48, 0
    %64 = vmatprep.subr.mxu0 0.0
    %65 = vmatpush1.msra.mxu0 %v49
    %66 = vmatprep.subr.mxu0 0.0
    %67 = vmatpush1.msra.mxu0 %v50
    %68 = vmatprep.subr.mxu0 0.0
    %69 = vmatpush1.msra.mxu0 %v51
    %70 = vmatprep.subr.mxu0 0.0
    %71 = vmatpush1.msra.mxu0 %v52
    %72 = vmatprep.subr.mxu0 0.0
    %73 = vmatpush1.msra.mxu0 0.0
    %74 = vmatprep.subr.mxu0 0.0
    %75 = vmatpush1.msra.mxu0 0.0
    %76 = vmatprep.subr.mxu0 0.0
    %77 = vmatpush1.msra.mxu0 0.0
    %78 = vmatprep.subr.mxu0 0.0
    %79 = vmatpush1.msra.mxu0 0.0
    %80 = vmatprep.subr.mxu0 0.0
    %81 = vmatpush1.msra.mxu0 0.0
    %82 = vmatprep.subr.mxu0 0.0
    %83 = vmatpush1.msra.mxu0 0.0
    %84 = vmatprep.subr.mxu0 0.0
    %85 = vmatpush1.msra.mxu0 0.0
    %86 = vmatprep.subr.mxu0 0.0
    %87 = vmatpush1.msra.mxu0 0.0
    %88 = vmatprep.subr.mxu0 0.0
    %89 = vmatpush1.msra.mxu0 0.0
    %90 = vmatprep.subr.mxu0 0.0
    %91 = vmatpush1.msra.mxu0 0.0
    %92 = vmatprep.subr.mxu0 0.0
    %93 = vmatpush1.msra.mxu0 0.0
    %94 = vmatprep.subr.mxu0 0.0
    %95 = vmatpush1.msra.mxu0 0.0
    %96 = vmatprep.subr.mxu0 0.0
    %97 = vmatpush1.msra.mxu0 0.0
    %98 = vmatprep.subr.mxu0 0.0
    %99 = vmatpush1.msra.mxu0 0.0
    %100 = vmatprep.subr.mxu0 0.0
    %101 = vmatpush1.msra.mxu0 0.0
    %102 = vmatprep.subr.mxu0 0.0
    %103 = vmatpush1.msra.mxu0 0.0
    %104 = vmatprep.subr.mxu0 0.0
    %105 = vmatpush1.msra.mxu0 0.0
    %106 = vmatprep.subr.mxu0 0.0
    %107 = vmatpush1.msra.mxu0 0.0
    %108 = vmatprep.subr.mxu0 0.0
    %109 = vmatpush1.msra.mxu0 0.0
    %110 = vmatprep.subr.mxu0 0.0
    %111 = vmatpush1.msra.mxu0 0.0
    %112 = vmatprep.subr.mxu0 0.0
    %113 = vmatpush1.msra.mxu0 0.0
    %114 = vmatprep.subr.mxu0 0.0
    %115 = vmatpush1.msra.mxu0 0.0
    %116 = vmatprep.subr.mxu0 0.0
    %117 = vmatpush1.msra.mxu0 0.0
    %118 = vmatprep.subr.mxu0 0.0
    %119 = vmatpush1.msra.mxu0 0.0
    %120 = vmatprep.subr.mxu0 0.0
    %121 = vmatpush1.msra.mxu0 0.0
    %122 = vmatprep.subr.mxu0 0.0
    %123 = vmatpush1.msra.mxu0 0.0
    %124 = vmatprep.subr.mxu0 0.0
    %125 = vmatpush1.msra.mxu0 0.0
    %126 = vmatprep.subr.mxu0 0.0
    %127 = vmatpush1.msra.mxu0 0.0
    %128 = vmatprep.mubr.f32.mxu0 0.0
    %129 = vmatmul.mubr.f32.gmra.mrb[0].mxu0 %v62
    %v130 = vpop.f32.mrb[0].mxu0
    %v131 = vadd.f32 %v58, %v130
    %v132 = vpop.f32.mrb[0].mxu0
    %133 = vdwg.mxu0
    %134 = vst [vmem:[#allocation7] sm:$0x3] %v131
    // Predicated region
    $region22: #{tpu_custom_call.1} parent=1 // pred_check
      _
    $region23: #{tpu_custom_call.1} parent=1 // pred_check_branch
      %136 = sbr.rel (0) target = $region25
    $region24: #{tpu_custom_call.1} parent=1 // pred_region
      %s138 = ssub.s32 32, 32
      %139 = vsyncadd [#allocation4], %s138
      %s141 = sshll.u32 [#allocation7], 4
      %s142 = int_to_ptr.vmem [resolvable:$true] %s141
      %144 = dma.vmem_to_hbm [thread:$0]  %s142, 32, %s3, [#allocation4]
    $region25: #{tpu_custom_call.1} parent=1 // pred_fallthru
      _
    // Predicated region
    $region26: #{tpu_custom_call.1} parent=1 // pred_check
      _
    $region27: #{tpu_custom_call.1} parent=1 // pred_check_branch
      %146 = sbr.rel (0) target = $region29
    $region28: #{tpu_custom_call.1} parent=1 // pred_region
      %147 = dma.done [#allocation4], 32
    $region29: #{tpu_custom_call.1} parent=1 // pred_fallthru
      _
    %148 = vsyncpa [#allocation3], 1
    %149 = vsyncpa [#allocation6], 1
    %150 = vsyncpa [#allocation4], 1

</llo_original>
